<compile_context>
chip_gen: v7x
topology: tpu7x:2x2x1
jax: 0.10.0
libtpu: 0.0.40
codegen_flags: <defaults>
</compile_context>

<pallas_src>
import numpy as np

import jax
import jax.numpy as jnp
from jax.experimental import pallas as pl
from jax.experimental.pallas import tpu as pltpu


def _linear_kernel(x_ref, w_ref, b_ref, o_ref):
    # x_ref: (TM, Din) native dtype, w_ref: (Din, Dout) compute dtype,
    # b_ref: (1, Dout) f32, o_ref: (TM, Dout) out dtype.
    x = x_ref[...]
    w = w_ref[...]
    if x.dtype != w.dtype:
        x = x.astype(w.dtype)  # in-kernel cast: free (VPU slack), avoids an XLA pass
    z = jnp.dot(x, w, preferred_element_type=jnp.float32)
    o_ref[...] = (z + b_ref[...]).astype(o_ref.dtype)


def _round_up(n, m):
    return (n + m - 1) // m * m


def gan_discriminator_forward(x, w, b, *, compute_dtype=jnp.bfloat16,
                              tile_budget_bytes=24 << 20):
    """Forward pass of GAN_Discriminator: x @ W + b.

    x: (B, D)        activations (any float dtype; cast to bf16 inside kernel)
    w: (D, 2)        transposed PyTorch Linear weight
    b: (2,)          bias
    returns: (B, 2) in x.dtype
    """
    B, D = x.shape
    assert w.shape[0] == D, (w.shape, D)
    n_out = w.shape[1]
    out_dtype = x.dtype

    # Weight / bias are tiny; casting them in the wrapper is negligible.
    w_c = w.astype(compute_dtype)
    b2 = b.reshape(1, n_out).astype(jnp.float32)

    # ---- Lane packing for small D: pack 128/D rows per 128-lane vreg row ----
    lane_pack = (D <= 64) and (128 % D == 0) and ((B * D) % 128 == 0)
    if lane_pack:
        pack = 128 // D
        x_in = x.reshape((B * D) // 128, 128)                    # free contiguous reshape
        w_in = jnp.kron(jnp.eye(pack, dtype=compute_dtype), w_c)  # (128, n_out*pack) block-diag
        b_in = jnp.tile(b2, (1, pack))                            # (1, n_out*pack)
    else:
        pack = 1
        x_in, w_in, b_in = x, w_c, b2

    rows, d_in = x_in.shape
    d_out = w_in.shape[1]

    # ---- Tile sizing: bytes per row with lane dim padded to 128, both the
    # double-buffered input tile and the double-buffered output tile counted.
    x_row_bytes = _round_up(d_in, 128) * np.dtype(x_in.dtype).itemsize
    o_row_bytes = _round_up(d_out, 128) * np.dtype(out_dtype).itemsize
    per_row_bytes = 2 * (x_row_bytes + o_row_bytes)
    tm = tile_budget_bytes // per_row_bytes
    # Keep >= ~2 grid steps so v7x's two TensorCores both get rows (no-op on
    # single-TC v5e/v6e), and don't over-tile a tiny batch.
    tm = min(tm, _round_up(pl.cdiv(rows, 2), 16), _round_up(rows, 16))
    tm = max(16, (tm // 16) * 16)

    grid = (pl.cdiv(rows, tm),)   # ragged last block handled by Pallas, no jnp.pad

    # VMEM limit: 32 MiB is safe on every generation (v7x has 64 MiB total);
    # bump only if a very large D would not fit even the minimum tile.
    w_bytes = 2 * _round_up(d_in, 8) * _round_up(d_out, 128) * np.dtype(compute_dtype).itemsize
    vmem_limit = max(32 << 20, tm * per_row_bytes + w_bytes + (4 << 20))

    out = pl.pallas_call(
        _linear_kernel,
        out_shape=jax.ShapeDtypeStruct((rows, d_out), out_dtype),
        grid_spec=pl.GridSpec(
            grid=grid,
            in_specs=[
                pl.BlockSpec((tm, d_in), lambda i: (i, 0)),     # x: streamed row tiles
                pl.BlockSpec((d_in, d_out), lambda i: (0, 0)),  # w: VMEM-resident
                pl.BlockSpec((1, d_out), lambda i: (0, 0)),     # b: VMEM-resident
            ],
            out_specs=pl.BlockSpec((tm, d_out), lambda i: (i, 0)),
        ),
        compiler_params=pltpu.CompilerParams(
            dimension_semantics=("parallel",),   # independent row tiles -> megacore split
            vmem_limit_bytes=int(vmem_limit),
        ),
    )(x_in, w_in, b_in)

    if lane_pack:
        out = out.reshape(B, n_out)   # free contiguous reshape back to (B, 2)
    return out


if __name__ == "__main__":
    key = jax.random.PRNGKey(0)
    k_x, k_w, k_b, k_x2 = jax.random.split(key, 4)

    int_dim = 32

    # Synthetic parameters mimicking nn.Linear(int_dim, 2):
    #   PyTorch weight shape (2, int_dim); we store its transpose (int_dim, 2).
    bound = 1.0 / (int_dim ** 0.5)
    w = jax.random.uniform(k_w, (int_dim, 2), jnp.float32, -bound, bound)
    b = jax.random.uniform(k_b, (2,), jnp.float32, -bound, bound)

    def ref_fn(x):
        # Matches the kernel's MXU path: bf16-rounded inputs, exact f32
        # products, f32 accumulation, f32 bias add.
        return (x.astype(jnp.bfloat16).astype(jnp.float32)
                @ w.astype(jnp.bfloat16).astype(jnp.float32)) + b[None, :]

    # Case 1: batch divisible by the lane-pack factor (128/32 = 4) ->
    # lane-packed path, 2 grid steps with a ragged last block.
    x1 = jax.random.normal(k_x, (96, int_dim), jnp.float32)
    out1 = jax.block_until_ready(gan_discriminator_forward(x1, w, b))
    assert out1.shape == (96, 2) and out1.dtype == x1.dtype
    assert jnp.allclose(out1, ref_fn(x1), atol=1e-3, rtol=1e-3)

    # Case 2: odd batch -> unpacked fallback, single partial block.
    x2 = jax.random.normal(k_x2, (13, int_dim), jnp.float32)
    out2 = jax.block_until_ready(gan_discriminator_forward(x2, w, b))
    assert out2.shape == (13, 2) and out2.dtype == x2.dtype
    assert jnp.allclose(out2, ref_fn(x2), atol=1e-3, rtol=1e-3)

    print("KERNEL_OK")
</pallas_src>

<mosaic_0001>
module attributes {stable_mosaic.version = 11 : i64} {
  func.func @_linear_kernel(%arg0: i32, %arg1: memref<16x128xf32, #tpu.memory_space<vmem>>, %arg2: memref<128x8xbf16, #tpu.memory_space<vmem>>, %arg3: memref<1x8xf32, #tpu.memory_space<vmem>>, %arg4: memref<16x8xf32, #tpu.memory_space<vmem>>) attributes {dimension_semantics = [#tpu.dimension_semantics<parallel>], iteration_bounds = array<i64: 2>, scalar_prefetch = 0 : i64, scratch_operands = 0 : i64, tpu.core_type = #tpu.core_type<tc>, window_params = [{transform_indices = @transform_0, window_bounds = array<i64: 16, 128>}, {pipeline_mode = #tpu.pipeline_mode<synchronous>, transform_indices = @transform_1, window_bounds = array<i64: 128, 8>}, {pipeline_mode = #tpu.pipeline_mode<synchronous>, transform_indices = @transform_2, window_bounds = array<i64: 1, 8>}, {transform_indices = @transform_3, window_bounds = array<i64: 16, 8>}]} {
    %c0 = arith.constant 0 : index
    %c0_0 = arith.constant 0 : index
    %0 = vector.load %arg1[%c0, %c0_0] : memref<16x128xf32, #tpu.memory_space<vmem>>, vector<16x128xf32>
    %c0_1 = arith.constant 0 : index
    %c0_2 = arith.constant 0 : index
    %1 = vector.load %arg2[%c0_1, %c0_2] : memref<128x8xbf16, #tpu.memory_space<vmem>>, vector<128x8xbf16>
    %2 = arith.truncf %0 : vector<16x128xf32> to vector<16x128xbf16>
    %cst = arith.constant dense<0.000000e+00> : vector<16x8xf32>
    %3 = tpu.matmul %2, %1, %cst {dimension_numbers = #tpu.dot_dimension_numbers<[1], [0], [0], [1], [0, 0, 1, 1], [], []>} : vector<16x128xbf16>, vector<128x8xbf16>, vector<16x8xf32> -> vector<16x8xf32>
    %c0_3 = arith.constant 0 : index
    %c0_4 = arith.constant 0 : index
    %4 = vector.load %arg3[%c0_3, %c0_4] : memref<1x8xf32, #tpu.memory_space<vmem>>, vector<1x8xf32>
    %5 = vector.broadcast %4 : vector<1x8xf32> to vector<16x8xf32>
    %6 = arith.addf %3, %5 : vector<16x8xf32>
    %c0_5 = arith.constant 0 : index
    %c0_6 = arith.constant 0 : index
    %7 = vector.load %arg4[%c0_5, %c0_6] : memref<16x8xf32, #tpu.memory_space<vmem>>, vector<16x8xf32>
    tpu.vector_store %arg4[%c0_5, %c0_6], %6 {strides = array<i32>} : memref<16x8xf32, #tpu.memory_space<vmem>>, vector<16x8xf32>,
    return
  }
  func.func @transform_0(%arg0: i32) -> (i32, i32) {
    %c0_i32 = arith.constant 0 : i32
    %c0_i32_0 = arith.constant 0 : i32
    return %arg0, %c0_i32 : i32, i32
  }
  func.func @transform_1(%arg0: i32) -> (i32, i32) {
    %c0_i32 = arith.constant 0 : i32
    %c0_i32_0 = arith.constant 0 : i32
    %c0_i32_1 = arith.constant 0 : i32
    return %c0_i32, %c0_i32_0 : i32, i32
  }
  func.func @transform_2(%arg0: i32) -> (i32, i32) {
    %c0_i32 = arith.constant 0 : i32
    %c0_i32_0 = arith.constant 0 : i32
    %c0_i32_1 = arith.constant 0 : i32
    return %c0_i32, %c0_i32_0 : i32, i32
  }
  func.func @transform_3(%arg0: i32) -> (i32, i32) {
    %c0_i32 = arith.constant 0 : i32
    %c0_i32_0 = arith.constant 0 : i32
    return %arg0, %c0_i32 : i32, i32
  }
}

</mosaic_0001>

<llo_original>
// kernel: tpu_custom_call.1
$region0: #{tpu_custom_call.1}
  #allocation0 [shape = 'u32[]', space=smem, size = 0x4, offset = 0x4, fixed_abs, tag = 'smem constant byte address 0x4 - core index']
  #allocation1 [shape = 'u32[144,128]{1,0:T(1,128)}', space=vmem, size = 0x12000, scoped, tag = 'internal scratch']
  %s0 = inlined_call_operand.vmem [shape: f32[24,128], index: 0, kind: input, shape index: {}]
  %s1 = inlined_call_operand.vmem [shape: bf16[128,8], index: 1, kind: input, shape index: {}]
  %s2 = inlined_call_operand.vmem [shape: f32[1,8], index: 2, kind: input, shape index: {}]
  %s3 = inlined_call_operand.vmem [shape: f32[24,8], index: 3, kind: output, shape index: {}]
  %s4 = sld [smem:[#allocation0]]
  $region93: #{tpu_custom_call.1} parent=0
    _
  %s6 = ssub.s32 1, %s4
  %s7 = scalar_select 0, %s6, %s4
  $region1: #{tpu_custom_call.1} parent=0
    #allocation2 [shape = 'u8[16384]{0}', space=vmem, size = 0x4000, scoped, tag = 'output window, operand 0']
    loop: start=0, step=1, limit=4
    $region2: #{tpu_custom_call.1} parent=1 // loop_pre_header
      _
    $region3: #{tpu_custom_call.1} parent=1 // loop_header
      %s9 = sphi 0, %s13
      %p10 = scmp.ge.s32.totalorder %s9, 4
      %s19 = sphi 0, %s21
      %s22 = sphi 0, %s19
      %s23 = sphi 0, %s22
      %s39 = sphi 0, %s23
      %s43 = sphi 0, %s43
      %s45 = sphi 0, %s43
      %s46 = sphi 0, %s45
      %s60 = sphi 0, %s46
      %s64 = sphi 0, %s64
      %s66 = sphi 0, %s64
      %s67 = sphi 0, %s66
      %s81 = sphi 0, %s67
      %s87 = sphi 0, %s89
      %s90 = sphi 0, %s87
      %s91 = sphi 0, %s90
      %s107 = sphi 0, %s91
    $region4: #{tpu_custom_call.1} parent=1 // loop_header_branch
      %12 = sbr.rel (%p10) target = $region8
    $region5: #{tpu_custom_call.1} parent=1 // loop_body
      %s14 = ssub.s32 %s9, 1
      %s15 = ssub.s32 %s9, 2
      %s16 = sadd.s32 %s9, 1
      %s17 = ssub.s32 %s9, %s16
      %p18 = scmp.eq.s32.totalorder %s17, 0
      %s20 = sadd.s32 %s19, 1
      %s21 = scalar_select %p18, %s19, %s20
      %p24 = pneg %p18
      %p25 = scmp.eq.s32.totalorder %s9, 1
      %p26 = por %p24, %p25
      %p27 = scmp.ne.s32.totalorder %s19, %s22
      %p28 = scmp.eq.s32.totalorder %s9, 0
      %p29 = por %p27, %p28
      %p30 = scmp.ne.s32.totalorder %s19, %s22
      %p31 = scmp.eq.s32.totalorder %s14, 1
      %p32 = por %p30, %p31
      %p33 = scmp.ne.s32.totalorder %s22, %s23
      %p34 = scmp.eq.s32.totalorder %s14, 0
      %p35 = por %p33, %p34
      %p36 = scmp.ne.s32.totalorder %s22, %s23
      %p37 = scmp.eq.s32.totalorder %s15, 1
      %p38 = por %p36, %p37
      %p40 = scmp.ne.s32.totalorder %s23, %s39
      %p41 = scmp.eq.s32.totalorder %s15, 0
      %p42 = por %p40, %p41
      %s44 = sadd.s32 %s43, 1
      %p47 = scmp.eq.s32.totalorder %s9, 1
      %p48 = scmp.ne.s32.totalorder %s43, %s45
      %p49 = scmp.eq.s32.totalorder %s9, 0
      %p50 = por %p48, %p49
      %p51 = scmp.ne.s32.totalorder %s43, %s45
      %p52 = scmp.eq.s32.totalorder %s14, 1
      %p53 = por %p51, %p52
      %p54 = scmp.ne.s32.totalorder %s45, %s46
      %p55 = scmp.eq.s32.totalorder %s14, 0
      %p56 = por %p54, %p55
      %p57 = scmp.ne.s32.totalorder %s45, %s46
      %p58 = scmp.eq.s32.totalorder %s15, 1
      %p59 = por %p57, %p58
      %p61 = scmp.ne.s32.totalorder %s46, %s60
      %p62 = scmp.eq.s32.totalorder %s15, 0
      %p63 = por %p61, %p62
      %s65 = sadd.s32 %s64, 1
      %p68 = scmp.eq.s32.totalorder %s9, 1
      %p69 = scmp.ne.s32.totalorder %s64, %s66
      %p70 = scmp.eq.s32.totalorder %s9, 0
      %p71 = por %p69, %p70
      %p72 = scmp.ne.s32.totalorder %s64, %s66
      %p73 = scmp.eq.s32.totalorder %s14, 1
      %p74 = por %p72, %p73
      %p75 = scmp.ne.s32.totalorder %s66, %s67
      %p76 = scmp.eq.s32.totalorder %s14, 0
      %p77 = por %p75, %p76
      %p78 = scmp.ne.s32.totalorder %s66, %s67
      %p79 = scmp.eq.s32.totalorder %s15, 1
      %p80 = por %p78, %p79
      %p82 = scmp.ne.s32.totalorder %s67, %s81
      %p83 = scmp.eq.s32.totalorder %s15, 0
      %p84 = por %p82, %p83
      %s85 = ssub.s32 %s9, %s16
      %p86 = scmp.eq.s32.totalorder %s85, 0
      %s88 = sadd.s32 %s87, 1
      %s89 = scalar_select %p86, %s87, %s88
      %p92 = pneg %p86
      %p93 = scmp.eq.s32.totalorder %s9, 1
      %p94 = por %p92, %p93
      %p95 = scmp.ne.s32.totalorder %s87, %s90
      %p96 = scmp.eq.s32.totalorder %s9, 0
      %p97 = por %p95, %p96
      %p98 = scmp.ne.s32.totalorder %s87, %s90
      %p99 = scmp.eq.s32.totalorder %s14, 1
      %p100 = por %p98, %p99
      %p101 = scmp.ne.s32.totalorder %s90, %s91
      %p102 = scmp.eq.s32.totalorder %s14, 0
      %p103 = por %p101, %p102
      %p104 = scmp.ne.s32.totalorder %s90, %s91
      %p105 = scmp.eq.s32.totalorder %s15, 1
      %p106 = por %p104, %p105
      %p108 = scmp.ne.s32.totalorder %s91, %s107
      %p109 = scmp.eq.s32.totalorder %s15, 0
      %p110 = por %p108, %p109
      %p111 = scmp.le.s32.totalorder 1, %s9
      %p112 = scmp.lt.s32.totalorder %s9, 3
      %p113 = pnand %p111, %p112
      %p114 = pneg %p113
      // Predicated region
      $region9: #{tpu_custom_call.1} parent=5 // pred_check
        _
      $region10: #{tpu_custom_call.1} parent=5 // pred_check_branch
        %116 = sbr.rel (%p113) target = $region12
      $region11: #{tpu_custom_call.1} parent=5 // pred_region
        %s117 = ssub.s32 %s9, 1
        // Predicated region
        $region13: #{tpu_custom_call.1} parent=11 // pred_check
          %p118 = pneg %p56
        $region14: #{tpu_custom_call.1} parent=11 // pred_check_branch
          %120 = sbr.rel (%p118) target = $region16
        $region15: #{tpu_custom_call.1} parent=11 // pred_region
          _
        $region16: #{tpu_custom_call.1} parent=11 // pred_fallthru
          _
        // Predicated region
        $region17: #{tpu_custom_call.1} parent=11 // pred_check
          %p121 = pneg %p77
        $region18: #{tpu_custom_call.1} parent=11 // pred_check_branch
          %123 = sbr.rel (%p121) target = $region20
        $region19: #{tpu_custom_call.1} parent=11 // pred_region
          _
        $region20: #{tpu_custom_call.1} parent=11 // pred_fallthru
          _
      $region12: #{tpu_custom_call.1} parent=5 // pred_fallthru
        _
      %p124 = scmp.lt.s32.totalorder %s9, 2
      // Predicated region
      $region21: #{tpu_custom_call.1} parent=5 // pred_check
        %p125 = pneg %p124
      $region22: #{tpu_custom_call.1} parent=5 // pred_check_branch
        %127 = sbr.rel (%p125) target = $region24
      $region23: #{tpu_custom_call.1} parent=5 // pred_region
        // Predicated region
        $region25: #{tpu_custom_call.1} parent=23 // pred_check
          %p128 = pneg %p29
        $region26: #{tpu_custom_call.1} parent=23 // pred_check_branch
          %130 = sbr.rel (%p128) target = $region28
        $region27: #{tpu_custom_call.1} parent=23 // pred_region
          %s131 = smul.u32 2, %s9
          %s132 = ssub.s32 3, %s131
          %p133 = scmp.lt.s32.totalorder %s132, 2
          %s134 = scalar_select %p133, %s132, 2
          %s135 = smul.u32 128, %s134
          %p136 = scmp.lt.s32.totalorder %s131, 2
          %s137 = scalar_select %p136, %s131, 2
          %s138 = smul.addr %s137, 8
          %s139 = scalar_lea.vmem %s0, %s138
          %s140 = smul.u32 2, %s9
          %s141 = ssub.s32 3, %s140
          %p142 = scmp.lt.s32.totalorder %s141, 2
          %s143 = scalar_select %p142, %s141, 2
          %s144 = smul.u32 128, %s143
        $region28: #{tpu_custom_call.1} parent=23 // pred_fallthru
          _
      $region24: #{tpu_custom_call.1} parent=5 // pred_fallthru
        _
      %p145 = scmp.le.s32.totalorder 1, %s9
      %p146 = scmp.lt.s32.totalorder %s9, 3
      %p147 = pnand %p145, %p146
      %p148 = pneg %p147
      // Predicated region
      $region29: #{tpu_custom_call.1} parent=5 // pred_check
        _
      $region30: #{tpu_custom_call.1} parent=5 // pred_check_branch
        %150 = sbr.rel (%p147) target = $region32
      $region31: #{tpu_custom_call.1} parent=5 // pred_region
        %s151 = ssub.s32 %s9, 1
        %s152 = smul.u32 2, %s14
        %s153 = ssub.s32 3, %s152
        %p154 = scmp.lt.s32.totalorder %s153, 2
        %s155 = scalar_select %p154, %s153, 2
        %s156 = smul.u32 128, %s155
        %p157 = scmp.lt.s32.totalorder %s152, 2
        %s158 = scalar_select %p157, %s152, 2
        %s159 = smul.addr %s158, 8
        %s160 = scalar_lea.vmem %s0, %s159
        %p161 = pneg %p35
        %p162 = pneg %p32
        %p163 = pneg %p56
        %p164 = pneg %p53
        %p165 = pneg %p77
        %p166 = pneg %p74
        %p167 = pneg %p103
        %p168 = pneg %p100
        %s169 = sand.u32 %s90, 1
        %s170 = sand.u32 %s90, 1
        %s171 = smul.addr %s170, 16
        %s172 = scalar_lea.vmem [#allocation2], %s171
        %s173 = smul.u32 2, %s14
        %s174 = ssub.s32 3, %s173
        %p175 = scmp.lt.s32.totalorder %s174, 2
        %s176 = scalar_select %p175, %s174, 2
        %s177 = smul.u32 128, %s176
        %p178 = scmp.lt.s32.totalorder %s173, 2
        %s179 = scalar_select %p178, %s173, 2
        %s180 = smul.addr %s179, 8
        %s181 = scalar_lea.vmem %s0, %s180
        %s182 = smul.u32 2, %s14
        %s183 = ssub.s32 3, %s182
        %p184 = scmp.lt.s32.totalorder %s183, 2
        %s185 = scalar_select %p184, %s183, 2
        %s186 = smul.u32 128, %s185
        %s187 = smul.u32 2, %s14
        %s188 = ssub.s32 3, %s187
        %p189 = scmp.lt.s32.totalorder %s188, 2
        %s190 = scalar_select %p189, %s188, 2
        %s191 = smul.u32 128, %s190
        %v193 = vld [vmem:[%s181] sm:$0xff]
        %v194 = vld [vmem:[%s181 + $0x8] sm:$0xff]
        %v195 = vld [vmem:[%s1] sm:$0xf]
        %v196 = vld [vmem:[%s1 + $0x4] sm:$0xf]
        %v197 = vld [vmem:[%s1 + $0x8] sm:$0xf]
        %v198 = vld [vmem:[%s1 + $0xc] sm:$0xf]
        %v199 = vld [vmem:[%s1 + $0x10] sm:$0xf]
        %v200 = vld [vmem:[%s1 + $0x14] sm:$0xf]
        %v201 = vld [vmem:[%s1 + $0x18] sm:$0xf]
        %v202 = vld [vmem:[%s1 + $0x1c] sm:$0xf]
        %v203 = vld [vmem:[%s1 + $0x20] sm:$0xf]
        %v204 = vld [vmem:[%s1 + $0x24] sm:$0xf]
        %v205 = vld [vmem:[%s1 + $0x28] sm:$0xf]
        %v206 = vld [vmem:[%s1 + $0x2c] sm:$0xf]
        %v207 = vld [vmem:[%s1 + $0x30] sm:$0xf]
        %v208 = vld [vmem:[%s1 + $0x34] sm:$0xf]
        %v209 = vld [vmem:[%s1 + $0x38] sm:$0xf]
        %v210 = vld [vmem:[%s1 + $0x3c] sm:$0xf]
        %v211 = vpack.c.bf16 %v194, %v193
        %v212 = vld [vmem:[%s2] sm:$0x1]
        %v214 = vlaneseq
        %v215 = vshrl.u32 %v214, 7
        %v216 = vsub.s32 0, %v215
        %v217 = vrot.slane %v212, %v216
        %v235 = vunpack.c.l.b16 %v195
        %v236 = vunpack.c.l.b16 %v196
        %v237 = vunpack.c.l.b16 %v197
        %v238 = vunpack.c.l.b16 %v198
        %v239 = vunpack.c.l.b16 %v199
        %v240 = vunpack.c.l.b16 %v200
        %v241 = vunpack.c.l.b16 %v201
        %v242 = vunpack.c.l.b16 %v202
        %v243 = vunpack.c.l.b16 %v203
        %v244 = vunpack.c.l.b16 %v204
        %v245 = vunpack.c.l.b16 %v205
        %v246 = vunpack.c.l.b16 %v206
        %v247 = vunpack.c.l.b16 %v207
        %v248 = vunpack.c.l.b16 %v208
        %v249 = vunpack.c.l.b16 %v209
        %v250 = vunpack.c.l.b16 %v210
        %v251 = vpack.c.b16 %v236, %v235
        %v252 = vpack.c.b16 %v238, %v237
        %v253 = vpack.c.b16 %v240, %v239
        %v254 = vpack.c.b16 %v242, %v241
        %v255 = vpack.c.b16 %v244, %v243
        %v256 = vpack.c.b16 %v246, %v245
        %v257 = vpack.c.b16 %v248, %v247
        %v258 = vpack.c.b16 %v250, %v249
        %267 = vmatprep.subr.bf16.mxu0 0
        %268 = vmatpush1.bf16.msra.mxu0 %v251
        %269 = vmatprep.subr.bf16.mxu0 0
        %270 = vmatpush1.bf16.msra.mxu0 %v252
        %271 = vmatprep.subr.bf16.mxu0 0
        %272 = vmatpush1.bf16.msra.mxu0 %v253
        %273 = vmatprep.subr.bf16.mxu0 0
        %274 = vmatpush1.bf16.msra.mxu0 %v254
        %275 = vmatprep.subr.bf16.mxu0 0
        %276 = vmatpush1.bf16.msra.mxu0 %v255
        %277 = vmatprep.subr.bf16.mxu0 0
        %278 = vmatpush1.bf16.msra.mxu0 %v256
        %279 = vmatprep.subr.bf16.mxu0 0
        %280 = vmatpush1.bf16.msra.mxu0 %v257
        %281 = vmatprep.subr.bf16.mxu0 0
        %282 = vmatpush1.bf16.msra.mxu0 %v258
        %283 = vmatprep.subr.bf16.mxu0 0
        %284 = vmatpush1.bf16.msra.mxu0 0
        %285 = vmatprep.subr.bf16.mxu0 0
        %286 = vmatpush1.bf16.msra.mxu0 0
        %287 = vmatprep.subr.bf16.mxu0 0
        %288 = vmatpush1.bf16.msra.mxu0 0
        %289 = vmatprep.subr.bf16.mxu0 0
        %290 = vmatpush1.bf16.msra.mxu0 0
        %291 = vmatprep.subr.bf16.mxu0 0
        %292 = vmatpush1.bf16.msra.mxu0 0
        %293 = vmatprep.subr.bf16.mxu0 0
        %294 = vmatpush1.bf16.msra.mxu0 0
        %295 = vmatprep.subr.bf16.mxu0 0
        %296 = vmatpush1.bf16.msra.mxu0 0
        %297 = vmatprep.subr.bf16.mxu0 0
        %298 = vmatpush1.bf16.msra.mxu0 0
        %299 = vmatprep.mubr.bf16.mxu0 0
        %300 = vmatmul.mubr.bf16.gmra.mrb[0].mxu0 %v211
        %v301 = vpop.f32.mrb[0].mxu0
        %v302 = vadd.f32 %v217, %v301
        %v303 = vpop.f32.mrb[0].mxu0
        %v304 = vpop.f32.mrb[0].mxu0
        %v305 = vadd.f32 %v217, %v304
        %v306 = vpop.f32.mrb[0].mxu0
        %307 = vdwg.mxu0
        %vm308 = vcmask 64512
        %309 = vst.msk [vmem:[%s172] sm:$0xff] %vm308, %v302
        %310 = vst.msk [vmem:[%s172 + $0x8] sm:$0xff] %vm308, %v305
        %s311 = sand.u32 %s90, 1
        %s312 = sand.u32 %s90, 1
        %s313 = smul.addr %s312, 16
        %s314 = scalar_lea.vmem [#allocation2], %s313
        // Predicated region
        $region33: #{tpu_custom_call.1} parent=31 // pred_check
          %p315 = pneg %p100
        $region34: #{tpu_custom_call.1} parent=31 // pred_check_branch
          %317 = sbr.rel (%p315) target = $region36
        $region35: #{tpu_custom_call.1} parent=31 // pred_region
          %s318 = smul.u32 2, %s14
          %s319 = ssub.s32 3, %s318
          %p320 = scmp.lt.s32.totalorder %s319, 2
          %s321 = scalar_select %p320, %s319, 2
          %s322 = smul.u32 128, %s321
          %p323 = scmp.ne.s32.totalorder 0, %s322
          %s324 = smul.addr %s318, 8
          %s325 = scalar_lea.vmem %s3, %s324
          // Predicated region
          $region37: #{tpu_custom_call.1} parent=35 // pred_check
            %p326 = pneg %p323
          $region38: #{tpu_custom_call.1} parent=35 // pred_check_branch
            %328 = sbr.rel (%p326) target = $region40
          $region39: #{tpu_custom_call.1} parent=35 // pred_region
            // Predicated region
            $region41: #{tpu_custom_call.1} parent=39 // pred_check
              _
            $region42: #{tpu_custom_call.1} parent=39 // pred_check_branch
              %330 = sbr.rel (0) target = $region44
            $region43: #{tpu_custom_call.1} parent=39 // pred_region
              // Predicated region
              $region63: #{tpu_custom_call.1} parent=43 // pred_check
                _
              $region64: #{tpu_custom_call.1} parent=43 // pred_check_branch
                %381 = sbr.rel (0) target = $region66
              $region65: #{tpu_custom_call.1} parent=43 // pred_region
                %s382 = sshrl.u32 %s321, 1
                // While loop
                $region67: #{tpu_custom_call.1} parent=65 // loop_pre_header
                  _
                $region68: #{tpu_custom_call.1} parent=65 // loop_header
                  %s384 = sphi 0, %s386
                  %p385 = scmp.ge.s32.totalorder %s384, %s382
                  %s389 = sphi 0, %s398
                  %s390 = sphi %s314, %s401
                  %s391 = sphi %s325, %s402
                $region69: #{tpu_custom_call.1} parent=65 // loop_header_branch
                  %388 = sbr.rel (%p385) target = $region73
                $region70: #{tpu_custom_call.1} parent=65 // loop_body
                  %v392 = vld [vmem:[%s390] sm:$0xff]
                  %393 = vst [vmem:[%s391] sm:$0xff] %v392
                  %v394 = vld [vmem:[%s390 + $0x8] sm:$0xff]
                  %395 = vst [vmem:[%s391 + $0x8] sm:$0xff] %v394
                  %s396 = sadd.s32 1, %s389
                  %p397 = scmp.ge.s32.totalorder %s396, %s382
                  %s398 = scalar_select %p397, 0, %s396
                  %s399 = smul.u32 %s398, 16
                  %s400 = smul.u32 %s398, 16
                  %s401 = scalar_lea.vmem %s314, %s399 [#allocation2]
                  %s402 = scalar_lea.vmem %s325, %s400
                $region71: #{tpu_custom_call.1} parent=65 // loop_footer
                  %s386 = sadd.s32 %s384, 1
                $region72: #{tpu_custom_call.1} parent=65 // loop_footer_branch
                  %383 = sbr.rel target = $region68
                $region73: #{tpu_custom_call.1} parent=65 // loop_exit
                  _
                %s403 = sshrl.u32 %s321, 1
                %s404 = sand.u32 %s321, 1
                %s405 = smul.u32 %s403, 2
                %s406 = smul.u32 8, %s405
                %s407 = scalar_lea.vmem %s314, %s406 [#allocation2]
                %s408 = smul.u32 8, %s405
                %s409 = scalar_lea.vmem %s325, %s408
                // While loop
                $region74: #{tpu_custom_call.1} parent=65 // loop_pre_header
                  _
                $region75: #{tpu_custom_call.1} parent=65 // loop_header
                  %s411 = sphi 0, %s413
                  %p412 = scmp.ge.s32.totalorder %s411, %s404
                  %s416 = sphi 0, %s423
                  %s417 = sphi %s407, %s426
                  %s418 = sphi %s409, %s427
                $region76: #{tpu_custom_call.1} parent=65 // loop_header_branch
                  %415 = sbr.rel (%p412) target = $region80
                $region77: #{tpu_custom_call.1} parent=65 // loop_body
                  %v419 = vld [vmem:[%s417] sm:$0xff]
                  %420 = vst [vmem:[%s418] sm:$0xff] %v419
                  %s421 = sadd.s32 1, %s416
                  %p422 = scmp.ge.s32.totalorder %s421, %s404
                  %s423 = scalar_select %p422, 0, %s421
                  %s424 = smul.u32 %s423, 8
                  %s425 = smul.u32 %s423, 8
                  %s426 = scalar_lea.vmem %s407, %s424 [#allocation2]
                  %s427 = scalar_lea.vmem %s409, %s425
                $region78: #{tpu_custom_call.1} parent=65 // loop_footer
                  %s413 = sadd.s32 %s411, 1
                $region79: #{tpu_custom_call.1} parent=65 // loop_footer_branch
                  %410 = sbr.rel target = $region75
                $region80: #{tpu_custom_call.1} parent=65 // loop_exit
                  _
              $region66: #{tpu_custom_call.1} parent=43 // pred_fallthru
                _
              // Predicated region
              $region81: #{tpu_custom_call.1} parent=43 // pred_check
                _
              $region82: #{tpu_custom_call.1} parent=43 // pred_check_branch
                %429 = sbr.rel target = $region84
              $region83: #{tpu_custom_call.1} parent=43 // pred_region
                _
              $region84: #{tpu_custom_call.1} parent=43 // pred_fallthru
                _
            $region44: #{tpu_custom_call.1} parent=39 // pred_fallthru
              _
            // Predicated region
            $region45: #{tpu_custom_call.1} parent=39 // pred_check
              _
            $region46: #{tpu_custom_call.1} parent=39 // pred_check_branch
              %332 = sbr.rel target = $region48
            $region47: #{tpu_custom_call.1} parent=39 // pred_region
              %s334 = sshrl.u32 %s321, 1
              // While loop
              $region49: #{tpu_custom_call.1} parent=47 // loop_pre_header
                _
              $region50: #{tpu_custom_call.1} parent=47 // loop_header
                %s336 = sphi 0, %s338
                %p337 = scmp.ge.s32.totalorder %s336, %s334
                %s341 = sphi 0, %s350
                %s342 = sphi %s314, %s353
                %s343 = sphi %s325, %s354
              $region51: #{tpu_custom_call.1} parent=47 // loop_header_branch
                %340 = sbr.rel (%p337) target = $region55
              $region52: #{tpu_custom_call.1} parent=47 // loop_body
                %v344 = vld [vmem:[%s342] sm:$0xff]
                %345 = vst [vmem:[%s343] sm:$0xff] %v344
                %v346 = vld [vmem:[%s342 + $0x8] sm:$0xff]
                %347 = vst [vmem:[%s343 + $0x8] sm:$0xff] %v346
                %s348 = sadd.s32 1, %s341
                %p349 = scmp.ge.s32.totalorder %s348, %s334
                %s350 = scalar_select %p349, 0, %s348
                %s351 = smul.u32 %s350, 16
                %s352 = smul.u32 %s350, 16
                %s353 = scalar_lea.vmem %s314, %s351 [#allocation2]
                %s354 = scalar_lea.vmem %s325, %s352
              $region53: #{tpu_custom_call.1} parent=47 // loop_footer
                %s338 = sadd.s32 %s336, 1
              $region54: #{tpu_custom_call.1} parent=47 // loop_footer_branch
                %335 = sbr.rel target = $region50
              $region55: #{tpu_custom_call.1} parent=47 // loop_exit
                _
              %s355 = sshrl.u32 %s321, 1
              %s356 = sand.u32 %s321, 1
              %s357 = smul.u32 %s355, 2
              %s358 = smul.u32 8, %s357
              %s359 = scalar_lea.vmem %s314, %s358 [#allocation2]
              %s360 = smul.u32 8, %s357
              %s361 = scalar_lea.vmem %s325, %s360
              // While loop
              $region56: #{tpu_custom_call.1} parent=47 // loop_pre_header
                _
              $region57: #{tpu_custom_call.1} parent=47 // loop_header
                %s363 = sphi 0, %s365
                %p364 = scmp.ge.s32.totalorder %s363, %s356
                %s368 = sphi 0, %s375
                %s369 = sphi %s359, %s378
                %s370 = sphi %s361, %s379
              $region58: #{tpu_custom_call.1} parent=47 // loop_header_branch
                %367 = sbr.rel (%p364) target = $region62
              $region59: #{tpu_custom_call.1} parent=47 // loop_body
                %v371 = vld [vmem:[%s369] sm:$0xff]
                %372 = vst [vmem:[%s370] sm:$0xff] %v371
                %s373 = sadd.s32 1, %s368
                %p374 = scmp.ge.s32.totalorder %s373, %s356
                %s375 = scalar_select %p374, 0, %s373
                %s376 = smul.u32 %s375, 8
                %s377 = smul.u32 %s375, 8
                %s378 = scalar_lea.vmem %s359, %s376 [#allocation2]
                %s379 = scalar_lea.vmem %s361, %s377
              $region60: #{tpu_custom_call.1} parent=47 // loop_footer
                %s365 = sadd.s32 %s363, 1
              $region61: #{tpu_custom_call.1} parent=47 // loop_footer_branch
                %362 = sbr.rel target = $region57
              $region62: #{tpu_custom_call.1} parent=47 // loop_exit
                _
            $region48: #{tpu_custom_call.1} parent=39 // pred_fallthru
              _
          $region40: #{tpu_custom_call.1} parent=35 // pred_fallthru
            _
          %430 = vnop
        $region36: #{tpu_custom_call.1} parent=31 // pred_fallthru
          _
      $region32: #{tpu_custom_call.1} parent=5 // pred_fallthru
        _
      %p431 = scmp.le.s32.totalorder 2, %s9
      // Predicated region
      $region85: #{tpu_custom_call.1} parent=5 // pred_check
        %p432 = pneg %p431
      $region86: #{tpu_custom_call.1} parent=5 // pred_check_branch
        %434 = sbr.rel (%p432) target = $region88
      $region87: #{tpu_custom_call.1} parent=5 // pred_region
        %s435 = ssub.s32 %s9, 2
        // Predicated region
        $region89: #{tpu_custom_call.1} parent=87 // pred_check
          %p436 = pneg %p106
        $region90: #{tpu_custom_call.1} parent=87 // pred_check_branch
          %438 = sbr.rel (%p436) target = $region92
        $region91: #{tpu_custom_call.1} parent=87 // pred_region
          %s439 = sand.u32 %s91, 1
          %s440 = sand.u32 %s91, 1
          %s441 = smul.addr %s440, 16
          %s442 = scalar_lea.vmem [#allocation2], %s441
        $region92: #{tpu_custom_call.1} parent=87 // pred_fallthru
          _
      $region88: #{tpu_custom_call.1} parent=5 // pred_fallthru
        _
    $region6: #{tpu_custom_call.1} parent=1 // loop_footer
      %s13 = sadd.s32 1, %s9
    $region7: #{tpu_custom_call.1} parent=1 // loop_footer_branch
      %8 = sbr.rel target = $region3
    $region8: #{tpu_custom_call.1} parent=1 // loop_exit
      _

</llo_original>
